<compile_context>
chip_gen: v6e
topology: v6e:2x2x1
jax: 0.10.0
libtpu: 0.0.40
codegen_flags: <defaults>
</compile_context>

<pallas_src>
import functools

import jax
import jax.numpy as jnp
from jax.experimental import pallas as pl
from jax.experimental.pallas import tpu as pltpu

THRESHOLD = 1.0  # snn.Leaky default threshold
BETA = 0.9       # unused at t=0 with zero initial membrane (beta * 0 = 0)

H1 = 128         # fc1 out features (already lane-dense)
H2 = 64          # fc2 out features (logical)
LANE = 128
SUBLANE = 8
TB_MAX = 512     # large batch tile: kernel is overhead/HBM-bound, not MXU-bound


def _round_up(v, m):
    return (v + m - 1) // m * m


def _pad2d(a, rows, cols):
    """Zero-pad a 2-D array up to (rows, cols)."""
    r, c = a.shape
    return jnp.pad(a, ((0, rows - r), (0, cols - c)))


def snn_kernel(x_ref, w1_ref, b1_ref, w2_ref, b2_ref, w3_ref, b3_ref, out_ref):
    # x arrives as f32 (tb, input_dim); f32->bf16 cast is free VPU filler here
    # and avoids a separate XLA pad/cast pass over the batch in HBM.
    x = x_ref[...].astype(jnp.bfloat16)

    # fc1 + Leaky step 1: mem1 = fc1(x), spk1 = (mem1 > threshold)
    h1 = jnp.dot(x, w1_ref[...], preferred_element_type=jnp.float32) + b1_ref[...]
    spk1 = (h1 > THRESHOLD).astype(jnp.bfloat16)   # compare in f32; spikes exact 0/1

    # fc2 + Leaky step 2 (padded hidden units have 0 weight / 0 bias -> never spike)
    h2 = jnp.dot(spk1, w2_ref[...], preferred_element_type=jnp.float32) + b2_ref[...]
    spk2 = (h2 > THRESHOLD).astype(jnp.bfloat16)

    # fc3 (readout, no spiking); lane-dense 128-wide f32 slab.
    out_ref[...] = (
        jnp.dot(spk2, w3_ref[...], preferred_element_type=jnp.float32) + b3_ref[...]
    )


def init_params(key, input_dim, output_dim):
    """nn.Linear-style U(-1/sqrt(fan_in), 1/sqrt(fan_in)) init, stored (in, out)."""
    def linear(key, fan_in, fan_out):
        kw, kb = jax.random.split(key)
        bound = 1.0 / jnp.sqrt(jnp.float32(fan_in))
        w = jax.random.uniform(kw, (fan_in, fan_out), jnp.float32, -bound, bound)
        b = jax.random.uniform(kb, (1, fan_out), jnp.float32, -bound, bound)
        return w, b

    k1, k2, k3 = jax.random.split(key, 3)
    w1, b1 = linear(k1, input_dim, H1)
    w2, b2 = linear(k2, H1, H2)
    w3, b3 = linear(k3, H2, output_dim)
    return {"w1": w1, "b1": b1, "w2": w2, "b2": b2, "w3": w3, "b3": b3}


def prepare_params(params, input_dim, output_dim):
    """Lane-pad hidden/output dims to 128 (zero fill) and cast weights to bf16.

    Correctness invariant: padded weight rows/cols AND padded bias lanes are
    exactly zero, and THRESHOLD > 0, so padded hidden units can never spike and
    padded output lanes stay identically zero until sliced away.
    """
    assert THRESHOLD > 0.0, "zero-padding correctness requires threshold > 0"

    h2_pad = _round_up(H2, LANE)
    out_pad = _round_up(output_dim, LANE)

    # w1 keeps its true input_dim rows: x is fed un-padded (block last dim ==
    # full array dim), so no input-dim padding is needed anywhere.
    w1 = params["w1"].astype(jnp.bfloat16)                               # (in, 128)
    b1 = params["b1"].astype(jnp.float32)                                # (1, 128)
    w2 = _pad2d(params["w2"], H1, h2_pad).astype(jnp.bfloat16)           # (128, 128)
    b2 = _pad2d(params["b2"], 1, h2_pad).astype(jnp.float32)             # (1, 128)
    w3 = _pad2d(params["w3"], h2_pad, out_pad).astype(jnp.bfloat16)      # (128, 128)
    b3 = _pad2d(params["b3"], 1, out_pad).astype(jnp.float32)            # (1, 128)
    return {"w1": w1, "b1": b1, "w2": w2, "b2": b2, "w3": w3, "b3": b3}


@functools.partial(jax.jit, static_argnames=("input_dim", "output_dim"))
def snn_forward(x, padded_params, *, input_dim, output_dim):
    """x: (B, input_dim) float32. padded_params: output of prepare_params."""
    w1, b1 = padded_params["w1"], padded_params["b1"]
    w2, b2 = padded_params["w2"], padded_params["b2"]
    w3, b3 = padded_params["w3"], padded_params["b3"]

    B = x.shape[0]
    out_pad = w3.shape[1]
    h2_pad = w2.shape[1]

    # Batch tiling (all shapes here are static Python ints):
    #  * tiny B  -> single sublane-aligned tile
    #  * large B -> big tiles (cap TB_MAX) with >= 2 tiles so the "parallel"
    #    grid axis can shard across v7x's two TensorCores.
    if B <= 128:
        tb = _round_up(B, SUBLANE)
    else:
        tb = min(TB_MAX, _round_up(pl.cdiv(B, 2), SUBLANE))
    n_tiles = pl.cdiv(B, tb)   # ragged final block: Pallas masks its stores

    flops = 2 * B * (input_dim * H1 + H1 * h2_pad + h2_pad * out_pad)
    bytes_accessed = (
        x.size * 4
        + w1.size * 2 + w2.size * 2 + w3.size * 2
        + b1.size * 4 + b2.size * 4 + b3.size * 4
        + B * out_pad * 4
    )

    def batch_spec(shape):
        return pl.BlockSpec(shape, lambda i: (i, 0))

    def resident_spec(shape):
        # Constant block index -> weights stay VMEM-resident across grid steps.
        return pl.BlockSpec(shape, lambda i: (0, 0))

    out = pl.pallas_call(
        snn_kernel,
        out_shape=jax.ShapeDtypeStruct((B, out_pad), jnp.float32),
        grid_spec=pltpu.PrefetchScalarGridSpec(
            num_scalar_prefetch=0,
            grid=(n_tiles,),
            in_specs=[
                batch_spec((tb, input_dim)),          # f32 x, last dim = full dim
                resident_spec(w1.shape), resident_spec(b1.shape),
                resident_spec(w2.shape), resident_spec(b2.shape),
                resident_spec(w3.shape), resident_spec(b3.shape),
            ],
            out_specs=batch_spec((tb, out_pad)),
        ),
        compiler_params=pltpu.CompilerParams(
            dimension_semantics=("parallel",),
        ),
        cost_estimate=pl.CostEstimate(
            flops=flops, transcendentals=0, bytes_accessed=bytes_accessed
        ),
    )(x, w1, b1, w2, b2, w3, b3)

    # Lane slice back to the logical output width (cheap for the caller to fold
    # into whatever consumes the logits).
    return out[:, :output_dim]


def reference_forward(x, padded_params, output_dim):
    """Pure-JAX reference using the same bf16-rounded operand values."""
    xb = x.astype(jnp.bfloat16).astype(jnp.float32)
    w1 = padded_params["w1"].astype(jnp.float32)
    w2 = padded_params["w2"].astype(jnp.float32)
    w3 = padded_params["w3"].astype(jnp.float32)
    h1 = xb @ w1 + padded_params["b1"]
    s1 = (h1 > THRESHOLD).astype(jnp.float32)
    h2 = s1 @ w2 + padded_params["b2"]
    s2 = (h2 > THRESHOLD).astype(jnp.float32)
    out = s2 @ w3 + padded_params["b3"]
    return out[:, :output_dim]


if __name__ == "__main__":
    key = jax.random.PRNGKey(0)
    kx, kp = jax.random.split(key)

    batch = 8
    input_dim = 64
    output_dim = 10

    # Scale inputs up a bit so some neurons actually cross the 1.0 threshold.
    x = 2.0 * jax.random.normal(kx, (batch, input_dim), jnp.float32)
    params = init_params(kp, input_dim, output_dim)
    padded_params = prepare_params(params, input_dim, output_dim)

    out = snn_forward(x, padded_params, input_dim=input_dim, output_dim=output_dim)
    out = jax.block_until_ready(out)

    ref = reference_forward(x, padded_params, output_dim)
    assert out.shape == (batch, output_dim)
    assert jnp.allclose(out, ref, atol=1e-4, rtol=1e-4), (
        float(jnp.max(jnp.abs(out - ref)))
    )

    print("KERNEL_OK")
</pallas_src>

<mosaic_0001>
module attributes {stable_mosaic.version = 11 : i64} {
  func.func @snn_kernel(%arg0: i32, %arg1: memref<8x64xf32, #tpu.memory_space<vmem>>, %arg2: memref<64x128xbf16, #tpu.memory_space<vmem>>, %arg3: memref<1x128xf32, #tpu.memory_space<vmem>>, %arg4: memref<128x128xbf16, #tpu.memory_space<vmem>>, %arg5: memref<1x128xf32, #tpu.memory_space<vmem>>, %arg6: memref<128x128xbf16, #tpu.memory_space<vmem>>, %arg7: memref<1x128xf32, #tpu.memory_space<vmem>>, %arg8: memref<8x128xf32, #tpu.memory_space<vmem>>) attributes {dimension_semantics = [#tpu.dimension_semantics<parallel>], iteration_bounds = array<i64: 1>, scalar_prefetch = 0 : i64, scratch_operands = 0 : i64, tpu.core_type = #tpu.core_type<tc>, window_params = [{transform_indices = @transform_0, window_bounds = array<i64: 8, 64>}, {pipeline_mode = #tpu.pipeline_mode<synchronous>, transform_indices = @transform_1, window_bounds = array<i64: 64, 128>}, {pipeline_mode = #tpu.pipeline_mode<synchronous>, transform_indices = @transform_2, window_bounds = array<i64: 1, 128>}, {pipeline_mode = #tpu.pipeline_mode<synchronous>, transform_indices = @transform_3, window_bounds = array<i64: 128, 128>}, {pipeline_mode = #tpu.pipeline_mode<synchronous>, transform_indices = @transform_4, window_bounds = array<i64: 1, 128>}, {pipeline_mode = #tpu.pipeline_mode<synchronous>, transform_indices = @transform_5, window_bounds = array<i64: 128, 128>}, {pipeline_mode = #tpu.pipeline_mode<synchronous>, transform_indices = @transform_6, window_bounds = array<i64: 1, 128>}, {transform_indices = @transform_7, window_bounds = array<i64: 8, 128>}]} {
    %c0 = arith.constant 0 : index
    %c0_0 = arith.constant 0 : index
    %0 = vector.load %arg1[%c0, %c0_0] : memref<8x64xf32, #tpu.memory_space<vmem>>, vector<8x64xf32>
    %1 = arith.truncf %0 : vector<8x64xf32> to vector<8x64xbf16>
    %c0_1 = arith.constant 0 : index
    %c0_2 = arith.constant 0 : index
    %2 = vector.load %arg2[%c0_1, %c0_2] : memref<64x128xbf16, #tpu.memory_space<vmem>>, vector<64x128xbf16>
    %cst = arith.constant dense<0.000000e+00> : vector<8x128xf32>
    %3 = tpu.matmul %1, %2, %cst {dimension_numbers = #tpu.dot_dimension_numbers<[1], [0], [0], [1], [0, 0, 1, 1], [], []>} : vector<8x64xbf16>, vector<64x128xbf16>, vector<8x128xf32> -> vector<8x128xf32>
    %c0_3 = arith.constant 0 : index
    %c0_4 = arith.constant 0 : index
    %4 = vector.load %arg3[%c0_3, %c0_4] : memref<1x128xf32, #tpu.memory_space<vmem>>, vector<1x128xf32>
    %5 = vector.broadcast %4 : vector<1x128xf32> to vector<8x128xf32>
    %6 = arith.addf %3, %5 : vector<8x128xf32>
    %cst_5 = arith.constant 1.000000e+00 : f32
    %7 = vector.broadcast %cst_5 : f32 to vector<8x128xf32>
    %8 = arith.cmpf ogt, %6, %7 : vector<8x128xf32>
    %9 = arith.extui %8 : vector<8x128xi1> to vector<8x128xi32>
    %10 = arith.sitofp %9 : vector<8x128xi32> to vector<8x128xf32>
    %11 = arith.truncf %10 : vector<8x128xf32> to vector<8x128xbf16>
    %c0_6 = arith.constant 0 : index
    %c0_7 = arith.constant 0 : index
    %12 = vector.load %arg4[%c0_6, %c0_7] : memref<128x128xbf16, #tpu.memory_space<vmem>>, vector<128x128xbf16>
    %cst_8 = arith.constant dense<0.000000e+00> : vector<8x128xf32>
    %13 = tpu.matmul %11, %12, %cst_8 {dimension_numbers = #tpu.dot_dimension_numbers<[1], [0], [0], [1], [0, 0, 1, 1], [], []>} : vector<8x128xbf16>, vector<128x128xbf16>, vector<8x128xf32> -> vector<8x128xf32>
    %c0_9 = arith.constant 0 : index
    %c0_10 = arith.constant 0 : index
    %14 = vector.load %arg5[%c0_9, %c0_10] : memref<1x128xf32, #tpu.memory_space<vmem>>, vector<1x128xf32>
    %15 = vector.broadcast %14 : vector<1x128xf32> to vector<8x128xf32>
    %16 = arith.addf %13, %15 : vector<8x128xf32>
    %cst_11 = arith.constant 1.000000e+00 : f32
    %17 = vector.broadcast %cst_11 : f32 to vector<8x128xf32>
    %18 = arith.cmpf ogt, %16, %17 : vector<8x128xf32>
    %19 = arith.extui %18 : vector<8x128xi1> to vector<8x128xi32>
    %20 = arith.sitofp %19 : vector<8x128xi32> to vector<8x128xf32>
    %21 = arith.truncf %20 : vector<8x128xf32> to vector<8x128xbf16>
    %c0_12 = arith.constant 0 : index
    %c0_13 = arith.constant 0 : index
    %22 = vector.load %arg6[%c0_12, %c0_13] : memref<128x128xbf16, #tpu.memory_space<vmem>>, vector<128x128xbf16>
    %cst_14 = arith.constant dense<0.000000e+00> : vector<8x128xf32>
    %23 = tpu.matmul %21, %22, %cst_14 {dimension_numbers = #tpu.dot_dimension_numbers<[1], [0], [0], [1], [0, 0, 1, 1], [], []>} : vector<8x128xbf16>, vector<128x128xbf16>, vector<8x128xf32> -> vector<8x128xf32>
    %c0_15 = arith.constant 0 : index
    %c0_16 = arith.constant 0 : index
    %24 = vector.load %arg7[%c0_15, %c0_16] : memref<1x128xf32, #tpu.memory_space<vmem>>, vector<1x128xf32>
    %25 = vector.broadcast %24 : vector<1x128xf32> to vector<8x128xf32>
    %26 = arith.addf %23, %25 : vector<8x128xf32>
    %c0_17 = arith.constant 0 : index
    %c0_18 = arith.constant 0 : index
    %27 = vector.load %arg8[%c0_17, %c0_18] : memref<8x128xf32, #tpu.memory_space<vmem>>, vector<8x128xf32>
    tpu.vector_store %arg8[%c0_17, %c0_18], %26 {strides = array<i32>} : memref<8x128xf32, #tpu.memory_space<vmem>>, vector<8x128xf32>,
    return
  }
  func.func @transform_0(%arg0: i32) -> (i32, i32) {
    %c0_i32 = arith.constant 0 : i32
    %c0_i32_0 = arith.constant 0 : i32
    return %arg0, %c0_i32 : i32, i32
  }
  func.func @transform_1(%arg0: i32) -> (i32, i32) {
    %c0_i32 = arith.constant 0 : i32
    %c0_i32_0 = arith.constant 0 : i32
    %c0_i32_1 = arith.constant 0 : i32
    return %c0_i32, %c0_i32_0 : i32, i32
  }
  func.func @transform_2(%arg0: i32) -> (i32, i32) {
    %c0_i32 = arith.constant 0 : i32
    %c0_i32_0 = arith.constant 0 : i32
    %c0_i32_1 = arith.constant 0 : i32
    return %c0_i32, %c0_i32_0 : i32, i32
  }
  func.func @transform_3(%arg0: i32) -> (i32, i32) {
    %c0_i32 = arith.constant 0 : i32
    %c0_i32_0 = arith.constant 0 : i32
    %c0_i32_1 = arith.constant 0 : i32
    return %c0_i32, %c0_i32_0 : i32, i32
  }
  func.func @transform_4(%arg0: i32) -> (i32, i32) {
    %c0_i32 = arith.constant 0 : i32
    %c0_i32_0 = arith.constant 0 : i32
    %c0_i32_1 = arith.constant 0 : i32
    return %c0_i32, %c0_i32_0 : i32, i32
  }
  func.func @transform_5(%arg0: i32) -> (i32, i32) {
    %c0_i32 = arith.constant 0 : i32
    %c0_i32_0 = arith.constant 0 : i32
    %c0_i32_1 = arith.constant 0 : i32
    return %c0_i32, %c0_i32_0 : i32, i32
  }
  func.func @transform_6(%arg0: i32) -> (i32, i32) {
    %c0_i32 = arith.constant 0 : i32
    %c0_i32_0 = arith.constant 0 : i32
    %c0_i32_1 = arith.constant 0 : i32
    return %c0_i32, %c0_i32_0 : i32, i32
  }
  func.func @transform_7(%arg0: i32) -> (i32, i32) {
    %c0_i32 = arith.constant 0 : i32
    %c0_i32_0 = arith.constant 0 : i32
    return %arg0, %c0_i32 : i32, i32
  }
}

</mosaic_0001>

<llo_original>
// kernel: snn_forward.1
$region0: #{snn_forward.1}
  #allocation0 [shape = 'u32[]', space=smem, size = 0x4, offset = 0x4, fixed_abs, tag = 'smem constant byte address 0x4 - core index']
  #allocation1 [shape = 'u32[144,128]{1,0:T(1,128)}', space=vmem, size = 0x12000, scoped, tag = 'internal scratch']
  %s0 = inlined_call_operand.hbm [shape: f32[8,64], index: 0, kind: input, shape index: {}]
  %s1 = inlined_call_operand.hbm [shape: bf16[64,128], index: 1, kind: input, shape index: {}]
  %s2 = inlined_call_operand.vmem [shape: f32[1,128], index: 2, kind: input, shape index: {}]
  %s3 = inlined_call_operand.hbm [shape: bf16[128,128], index: 3, kind: input, shape index: {}]
  %s4 = inlined_call_operand.vmem [shape: f32[1,128], index: 4, kind: input, shape index: {}]
  %s5 = inlined_call_operand.hbm [shape: bf16[128,128], index: 5, kind: input, shape index: {}]
  %s6 = inlined_call_operand.vmem [shape: f32[1,128], index: 6, kind: input, shape index: {}]
  %s7 = inlined_call_operand.hbm [shape: f32[8,128], index: 7, kind: output, shape index: {}]
  %s8 = sld [smem:[#allocation0]]
  $region54: #{snn_forward.1} parent=0
    _
  %s10 = ssub.s32 1, %s8
  %s11 = scalar_select 0, %s10, %s8
  $region1: #{snn_forward.1} parent=0
    #allocation2 [shape = 'u8[4096]{0}', space=vmem, size = 0x1000, scoped, tag = 'input window, operand 0, single buffered']
    #allocation3 [shape = 's32[1]{0}', space=sflag, size = 0x4, scoped, tag = 'scoped memory for snn_forward.1']
    #allocation4 [shape = 's32[1]{0}', space=sflag, size = 0x4, scoped, tag = 'scoped memory for snn_forward.1']
    #allocation5 [shape = 'u8[16384]{0}', space=vmem, size = 0x4000, scoped, tag = 'input window, operand 1, single buffered']
    #allocation6 [shape = 's32[1]{0}', space=sflag, size = 0x4, scoped, tag = 'scoped memory for snn_forward.1']
    #allocation7 [shape = 'u8[32768]{0}', space=vmem, size = 0x8000, scoped, tag = 'input window, operand 3, single buffered']
    #allocation8 [shape = 'u8[32768]{0}', space=vmem, size = 0x8000, scoped, tag = 'input window, operand 5, single buffered']
    #allocation9 [shape = 's32[1]{0}', space=sflag, size = 0x4, scoped, tag = 'scoped memory for snn_forward.1']
    #allocation10 [shape = 'u8[4096]{0}', space=vmem, size = 0x1000, scoped, tag = 'output window, operand 0, single buffered']
    %12 = vsyncpa [#allocation3], 0
    %13 = vsyncpa [#allocation6], 0
    %14 = vsyncpa [#allocation9], 0
    %15 = vsyncpa [#allocation4], 0
    // Predicated region
    $region2: #{snn_forward.1} parent=1 // pred_check
      _
    $region3: #{snn_forward.1} parent=1 // pred_check_branch
      %17 = sbr.rel (0) target = $region5
    $region4: #{snn_forward.1} parent=1 // pred_region
      %s19 = ssub.s32 128, 128
      %20 = vsyncadd [#allocation3], %s19
      %s22 = sshll.u32 [#allocation2], 4
      %s23 = int_to_ptr.vmem [resolvable:$true] %s22
      %25 = dma.hbm_to_vmem [thread:$0]  %s0, 128, %s23, [#allocation3]
    $region5: #{snn_forward.1} parent=1 // pred_fallthru
      _
    // Predicated region
    $region6: #{snn_forward.1} parent=1 // pred_check
      _
    $region7: #{snn_forward.1} parent=1 // pred_check_branch
      %27 = sbr.rel (0) target = $region9
    $region8: #{snn_forward.1} parent=1 // pred_region
      %s29 = ssub.s32 512, 512
      %30 = vsyncadd [#allocation6], %s29
      %s31 = sshll.u32 [#allocation5], 4
      %s32 = int_to_ptr.vmem [resolvable:$true] %s31
      %37 = dma.hbm_to_vmem [thread:$0]  %s1, 512, %s32, [#allocation6], 64, 64, 4
    $region9: #{snn_forward.1} parent=1 // pred_fallthru
      _
    // Predicated region
    $region10: #{snn_forward.1} parent=1 // pred_check
      _
    $region11: #{snn_forward.1} parent=1 // pred_check_branch
      %39 = sbr.rel (0) target = $region13
    $region12: #{snn_forward.1} parent=1 // pred_region
      _
    $region13: #{snn_forward.1} parent=1 // pred_fallthru
      _
    // Predicated region
    $region14: #{snn_forward.1} parent=1 // pred_check
      _
    $region15: #{snn_forward.1} parent=1 // pred_check_branch
      %41 = sbr.rel (0) target = $region17
    $region16: #{snn_forward.1} parent=1 // pred_region
      %s43 = ssub.s32 1024, 1024
      %44 = vsyncadd [#allocation6], %s43
      %s45 = sshll.u32 [#allocation7], 4
      %s46 = int_to_ptr.vmem [resolvable:$true] %s45
      %51 = dma.hbm_to_vmem [thread:$0]  %s3, 1024, %s46, [#allocation6], 64, 64, 4
    $region17: #{snn_forward.1} parent=1 // pred_fallthru
      _
    // Predicated region
    $region18: #{snn_forward.1} parent=1 // pred_check
      _
    $region19: #{snn_forward.1} parent=1 // pred_check_branch
      %53 = sbr.rel (0) target = $region21
    $region20: #{snn_forward.1} parent=1 // pred_region
      _
    $region21: #{snn_forward.1} parent=1 // pred_fallthru
      _
    // Predicated region
    $region22: #{snn_forward.1} parent=1 // pred_check
      _
    $region23: #{snn_forward.1} parent=1 // pred_check_branch
      %55 = sbr.rel (0) target = $region25
    $region24: #{snn_forward.1} parent=1 // pred_region
      %s57 = ssub.s32 1024, 1024
      %58 = vsyncadd [#allocation9], %s57
      %s59 = sshll.u32 [#allocation8], 4
      %s60 = int_to_ptr.vmem [resolvable:$true] %s59
      %65 = dma.hbm_to_vmem [thread:$0]  %s5, 1024, %s60, [#allocation9], 64, 64, 4
    $region25: #{snn_forward.1} parent=1 // pred_fallthru
      _
    // Predicated region
    $region26: #{snn_forward.1} parent=1 // pred_check
      _
    $region27: #{snn_forward.1} parent=1 // pred_check_branch
      %67 = sbr.rel (0) target = $region29
    $region28: #{snn_forward.1} parent=1 // pred_region
      _
    $region29: #{snn_forward.1} parent=1 // pred_fallthru
      _
    // Predicated region
    $region30: #{snn_forward.1} parent=1 // pred_check
      _
    $region31: #{snn_forward.1} parent=1 // pred_check_branch
      %69 = sbr.rel (0) target = $region33
    $region32: #{snn_forward.1} parent=1 // pred_region
      %70 = dma.done [#allocation3], 128
    $region33: #{snn_forward.1} parent=1 // pred_fallthru
      _
    // Predicated region
    $region34: #{snn_forward.1} parent=1 // pred_check
      _
    $region35: #{snn_forward.1} parent=1 // pred_check_branch
      %72 = sbr.rel (0) target = $region37
    $region36: #{snn_forward.1} parent=1 // pred_region
      %73 = dma.done [#allocation6], 512
    $region37: #{snn_forward.1} parent=1 // pred_fallthru
      _
    // Predicated region
    $region38: #{snn_forward.1} parent=1 // pred_check
      _
    $region39: #{snn_forward.1} parent=1 // pred_check_branch
      %75 = sbr.rel (0) target = $region41
    $region40: #{snn_forward.1} parent=1 // pred_region
      %76 = dma.done [#allocation6], 1024
    $region41: #{snn_forward.1} parent=1 // pred_fallthru
      _
    // Predicated region
    $region42: #{snn_forward.1} parent=1 // pred_check
      _
    $region43: #{snn_forward.1} parent=1 // pred_check_branch
      %78 = sbr.rel (0) target = $region45
    $region44: #{snn_forward.1} parent=1 // pred_region
      %79 = dma.done [#allocation9], 1024
    $region45: #{snn_forward.1} parent=1 // pred_fallthru
      _
    %v81 = vld [vmem:[#allocation2] sm:$0xff]
    %v82 = vpack.c.bf16 %v81, %v81
    %v83 = vld [vmem:[#allocation5] sm:$0xf]
    %v84 = vld [vmem:[#allocation5 + $0x4] sm:$0xf]
    %v85 = vld [vmem:[#allocation5 + $0x8] sm:$0xf]
    %v86 = vld [vmem:[#allocation5 + $0xc] sm:$0xf]
    %v87 = vld [vmem:[#allocation5 + $0x10] sm:$0xf]
    %v88 = vld [vmem:[#allocation5 + $0x14] sm:$0xf]
    %v89 = vld [vmem:[#allocation5 + $0x18] sm:$0xf]
    %v90 = vld [vmem:[#allocation5 + $0x1c] sm:$0xf]
    %v91 = vld [vmem:[%s2] sm:$0x1]
    %v93 = vlaneseq
    %v94 = vshrl.u32 %v93, 7
    %v95 = vsub.s32 0, %v94
    %v96 = vrot.slane %v91, %v95
    %v106 = vunpack.c.l.b16 %v83
    %v107 = vunpack.c.l.b16 %v84
    %v108 = vunpack.c.l.b16 %v85
    %v109 = vunpack.c.l.b16 %v86
    %v110 = vunpack.c.l.b16 %v87
    %v111 = vunpack.c.l.b16 %v88
    %v112 = vunpack.c.l.b16 %v89
    %v113 = vunpack.c.l.b16 %v90
    %v114 = vpack.c.b16 %v107, %v106
    %v115 = vpack.c.b16 %v109, %v108
    %v116 = vpack.c.b16 %v111, %v110
    %v117 = vpack.c.b16 %v113, %v112
    %vm122 = vcmask 523264
    %v124 = vsel %vm122, %v82, 0
    %126 = vmatprep.subr.bf16.mxu0 0
    %127 = vmatpush1.bf16.msra.mxu0 0
    %128 = vmatprep.subr.bf16.mxu0 0
    %129 = vmatpush1.bf16.msra.mxu0 0
    %130 = vmatprep.subr.bf16.mxu0 0
    %131 = vmatpush1.bf16.msra.mxu0 0
    %132 = vmatprep.subr.bf16.mxu0 0
    %133 = vmatpush1.bf16.msra.mxu0 0
    %134 = vmatprep.subr.bf16.mxu0 0
    %135 = vmatpush1.bf16.msra.mxu0 %v117
    %136 = vmatprep.subr.bf16.mxu0 0
    %137 = vmatpush1.bf16.msra.mxu0 %v116
    %138 = vmatprep.subr.bf16.mxu0 0
    %139 = vmatpush1.bf16.msra.mxu0 %v115
    %140 = vmatprep.subr.bf16.mxu0 0
    %141 = vmatpush1.bf16.msra.mxu0 %v114
    %142 = vmatprep.subr.bf16.mxu0 0
    %143 = vmatpush2.bf16.msra.mxu0 0
    %144 = vmatprep.subr.bf16.mxu0 0
    %145 = vmatpush2.bf16.msra.mxu0 0
    %146 = vmatprep.subr.bf16.mxu0 0
    %147 = vmatpush2.bf16.msra.mxu0 0
    %148 = vmatprep.subr.bf16.mxu0 0
    %149 = vmatpush2.bf16.msra.mxu0 0
    %150 = vmatprep.subr.bf16.mxu0 0
    %151 = vmatpush2.bf16.msra.mxu0 0
    %152 = vmatprep.subr.bf16.mxu0 0
    %153 = vmatpush2.bf16.msra.mxu0 0
    %154 = vmatprep.subr.bf16.mxu0 0
    %155 = vmatpush2.bf16.msra.mxu0 0
    %156 = vmatprep.subr.bf16.mxu0 0
    %157 = vmatpush2.bf16.msra.mxu0 0
    %158 = vmatprep.mubr.bf16.mxu0 0
    %159 = vmatmul.mubr.bf16.gmra.mxu0 %v124
    %v160 = vpop.f32.mrf.mxu0
    %v161 = vadd.f32 %v96, %v160
    %v162 = vpop.f32.mrf.mxu0
    %v163 = vpop.f32.mrf.mxu0
    %v164 = vpop.f32.mrf.mxu0
    %165 = vdwg.mxu0
    %vm166 = vcmp.gt.f32.partialorder %v161, 1.0
    %v167 = vsel %vm166, 1, 0
    %v168 = vcvt.s32.f32 %v167
    %v169 = vpack.c.bf16 %v168, %v168
    %v170 = vld [vmem:[#allocation7] sm:$0xf]
    %v171 = vld [vmem:[#allocation7 + $0x4] sm:$0xf]
    %v172 = vld [vmem:[#allocation7 + $0x8] sm:$0xf]
    %v173 = vld [vmem:[#allocation7 + $0xc] sm:$0xf]
    %v174 = vld [vmem:[#allocation7 + $0x10] sm:$0xf]
    %v175 = vld [vmem:[#allocation7 + $0x14] sm:$0xf]
    %v176 = vld [vmem:[#allocation7 + $0x18] sm:$0xf]
    %v177 = vld [vmem:[#allocation7 + $0x1c] sm:$0xf]
    %v178 = vld [vmem:[#allocation7 + $0x20] sm:$0xf]
    %v179 = vld [vmem:[#allocation7 + $0x24] sm:$0xf]
    %v180 = vld [vmem:[#allocation7 + $0x28] sm:$0xf]
    %v181 = vld [vmem:[#allocation7 + $0x2c] sm:$0xf]
    %v182 = vld [vmem:[#allocation7 + $0x30] sm:$0xf]
    %v183 = vld [vmem:[#allocation7 + $0x34] sm:$0xf]
    %v184 = vld [vmem:[#allocation7 + $0x38] sm:$0xf]
    %v185 = vld [vmem:[#allocation7 + $0x3c] sm:$0xf]
    %v186 = vld [vmem:[%s4] sm:$0x1]
    %v188 = vlaneseq
    %v189 = vshrl.u32 %v188, 7
    %v190 = vsub.s32 0, %v189
    %v191 = vrot.slane %v186, %v190
    %v209 = vunpack.c.l.b16 %v170
    %v210 = vunpack.c.l.b16 %v171
    %v211 = vunpack.c.l.b16 %v172
    %v212 = vunpack.c.l.b16 %v173
    %v213 = vunpack.c.l.b16 %v174
    %v214 = vunpack.c.l.b16 %v175
    %v215 = vunpack.c.l.b16 %v176
    %v216 = vunpack.c.l.b16 %v177
    %v217 = vunpack.c.l.b16 %v178
    %v218 = vunpack.c.l.b16 %v179
    %v219 = vunpack.c.l.b16 %v180
    %v220 = vunpack.c.l.b16 %v181
    %v221 = vunpack.c.l.b16 %v182
    %v222 = vunpack.c.l.b16 %v183
    %v223 = vunpack.c.l.b16 %v184
    %v224 = vunpack.c.l.b16 %v185
    %v225 = vpack.c.b16 %v210, %v209
    %v226 = vpack.c.b16 %v212, %v211
    %v227 = vpack.c.b16 %v214, %v213
    %v228 = vpack.c.b16 %v216, %v215
    %v229 = vpack.c.b16 %v218, %v217
    %v230 = vpack.c.b16 %v220, %v219
    %v231 = vpack.c.b16 %v222, %v221
    %v232 = vpack.c.b16 %v224, %v223
    %241 = vmatprep.subr.bf16.mxu0 0
    %242 = vmatpush1.bf16.msra.mxu0 %v232
    %243 = vmatprep.subr.bf16.mxu0 0
    %244 = vmatpush1.bf16.msra.mxu0 %v231
    %245 = vmatprep.subr.bf16.mxu0 0
    %246 = vmatpush1.bf16.msra.mxu0 %v230
    %247 = vmatprep.subr.bf16.mxu0 0
    %248 = vmatpush1.bf16.msra.mxu0 %v229
    %249 = vmatprep.subr.bf16.mxu0 0
    %250 = vmatpush1.bf16.msra.mxu0 %v228
    %251 = vmatprep.subr.bf16.mxu0 0
    %252 = vmatpush1.bf16.msra.mxu0 %v227
    %253 = vmatprep.subr.bf16.mxu0 0
    %254 = vmatpush1.bf16.msra.mxu0 %v226
    %255 = vmatprep.subr.bf16.mxu0 0
    %256 = vmatpush1.bf16.msra.mxu0 %v225
    %257 = vmatprep.subr.bf16.mxu0 0
    %258 = vmatpush2.bf16.msra.mxu0 0
    %259 = vmatprep.subr.bf16.mxu0 0
    %260 = vmatpush2.bf16.msra.mxu0 0
    %261 = vmatprep.subr.bf16.mxu0 0
    %262 = vmatpush2.bf16.msra.mxu0 0
    %263 = vmatprep.subr.bf16.mxu0 0
    %264 = vmatpush2.bf16.msra.mxu0 0
    %265 = vmatprep.subr.bf16.mxu0 0
    %266 = vmatpush2.bf16.msra.mxu0 0
    %267 = vmatprep.subr.bf16.mxu0 0
    %268 = vmatpush2.bf16.msra.mxu0 0
    %269 = vmatprep.subr.bf16.mxu0 0
    %270 = vmatpush2.bf16.msra.mxu0 0
    %271 = vmatprep.subr.bf16.mxu0 0
    %272 = vmatpush2.bf16.msra.mxu0 0
    %273 = vmatprep.mubr.bf16.mxu0 0
    %274 = vmatmul.mubr.bf16.gmra.mxu0 %v169
    %v275 = vpop.f32.mrf.mxu0
    %v276 = vadd.f32 %v191, %v275
    %v277 = vpop.f32.mrf.mxu0
    %v278 = vpop.f32.mrf.mxu0
    %v279 = vpop.f32.mrf.mxu0
    %280 = vdwg.mxu0
    %vm281 = vcmp.gt.f32.partialorder %v276, 1.0
    %v282 = vsel %vm281, 1, 0
    %v283 = vcvt.s32.f32 %v282
    %v284 = vpack.c.bf16 %v283, %v283
    %v285 = vld [vmem:[#allocation8] sm:$0xf]
    %v286 = vld [vmem:[#allocation8 + $0x4] sm:$0xf]
    %v287 = vld [vmem:[#allocation8 + $0x8] sm:$0xf]
    %v288 = vld [vmem:[#allocation8 + $0xc] sm:$0xf]
    %v289 = vld [vmem:[#allocation8 + $0x10] sm:$0xf]
    %v290 = vld [vmem:[#allocation8 + $0x14] sm:$0xf]
    %v291 = vld [vmem:[#allocation8 + $0x18] sm:$0xf]
    %v292 = vld [vmem:[#allocation8 + $0x1c] sm:$0xf]
    %v293 = vld [vmem:[#allocation8 + $0x20] sm:$0xf]
    %v294 = vld [vmem:[#allocation8 + $0x24] sm:$0xf]
    %v295 = vld [vmem:[#allocation8 + $0x28] sm:$0xf]
    %v296 = vld [vmem:[#allocation8 + $0x2c] sm:$0xf]
    %v297 = vld [vmem:[#allocation8 + $0x30] sm:$0xf]
    %v298 = vld [vmem:[#allocation8 + $0x34] sm:$0xf]
    %v299 = vld [vmem:[#allocation8 + $0x38] sm:$0xf]
    %v300 = vld [vmem:[#allocation8 + $0x3c] sm:$0xf]
    %v301 = vld [vmem:[%s6] sm:$0x1]
    %v303 = vlaneseq
    %v304 = vshrl.u32 %v303, 7
    %v305 = vsub.s32 0, %v304
    %v306 = vrot.slane %v301, %v305
    %v324 = vunpack.c.l.b16 %v285
    %v325 = vunpack.c.l.b16 %v286
    %v326 = vunpack.c.l.b16 %v287
    %v327 = vunpack.c.l.b16 %v288
    %v328 = vunpack.c.l.b16 %v289
    %v329 = vunpack.c.l.b16 %v290
    %v330 = vunpack.c.l.b16 %v291
    %v331 = vunpack.c.l.b16 %v292
    %v332 = vunpack.c.l.b16 %v293
    %v333 = vunpack.c.l.b16 %v294
    %v334 = vunpack.c.l.b16 %v295
    %v335 = vunpack.c.l.b16 %v296
    %v336 = vunpack.c.l.b16 %v297
    %v337 = vunpack.c.l.b16 %v298
    %v338 = vunpack.c.l.b16 %v299
    %v339 = vunpack.c.l.b16 %v300
    %v340 = vpack.c.b16 %v325, %v324
    %v341 = vpack.c.b16 %v327, %v326
    %v342 = vpack.c.b16 %v329, %v328
    %v343 = vpack.c.b16 %v331, %v330
    %v344 = vpack.c.b16 %v333, %v332
    %v345 = vpack.c.b16 %v335, %v334
    %v346 = vpack.c.b16 %v337, %v336
    %v347 = vpack.c.b16 %v339, %v338
    %356 = vmatprep.subr.bf16.mxu0 0
    %357 = vmatpush1.bf16.msra.mxu0 %v347
    %358 = vmatprep.subr.bf16.mxu0 0
    %359 = vmatpush1.bf16.msra.mxu0 %v346
    %360 = vmatprep.subr.bf16.mxu0 0
    %361 = vmatpush1.bf16.msra.mxu0 %v345
    %362 = vmatprep.subr.bf16.mxu0 0
    %363 = vmatpush1.bf16.msra.mxu0 %v344
    %364 = vmatprep.subr.bf16.mxu0 0
    %365 = vmatpush1.bf16.msra.mxu0 %v343
    %366 = vmatprep.subr.bf16.mxu0 0
    %367 = vmatpush1.bf16.msra.mxu0 %v342
    %368 = vmatprep.subr.bf16.mxu0 0
    %369 = vmatpush1.bf16.msra.mxu0 %v341
    %370 = vmatprep.subr.bf16.mxu0 0
    %371 = vmatpush1.bf16.msra.mxu0 %v340
    %372 = vmatprep.subr.bf16.mxu0 0
    %373 = vmatpush2.bf16.msra.mxu0 0
    %374 = vmatprep.subr.bf16.mxu0 0
    %375 = vmatpush2.bf16.msra.mxu0 0
    %376 = vmatprep.subr.bf16.mxu0 0
    %377 = vmatpush2.bf16.msra.mxu0 0
    %378 = vmatprep.subr.bf16.mxu0 0
    %379 = vmatpush2.bf16.msra.mxu0 0
    %380 = vmatprep.subr.bf16.mxu0 0
    %381 = vmatpush2.bf16.msra.mxu0 0
    %382 = vmatprep.subr.bf16.mxu0 0
    %383 = vmatpush2.bf16.msra.mxu0 0
    %384 = vmatprep.subr.bf16.mxu0 0
    %385 = vmatpush2.bf16.msra.mxu0 0
    %386 = vmatprep.subr.bf16.mxu0 0
    %387 = vmatpush2.bf16.msra.mxu0 0
    %388 = vmatprep.mubr.bf16.mxu0 0
    %389 = vmatmul.mubr.bf16.gmra.mxu0 %v284
    %v390 = vpop.f32.mrf.mxu0
    %v391 = vadd.f32 %v306, %v390
    %v392 = vpop.f32.mrf.mxu0
    %v393 = vpop.f32.mrf.mxu0
    %v394 = vpop.f32.mrf.mxu0
    %395 = vdwg.mxu0
    %396 = vst [vmem:[#allocation10] sm:$0xff] %v391
    // Predicated region
    $region46: #{snn_forward.1} parent=1 // pred_check
      _
    $region47: #{snn_forward.1} parent=1 // pred_check_branch
      %398 = sbr.rel (0) target = $region49
    $region48: #{snn_forward.1} parent=1 // pred_region
      %s400 = ssub.s32 128, 128
      %401 = vsyncadd [#allocation4], %s400
      %s403 = sshll.u32 [#allocation10], 4
      %s404 = int_to_ptr.vmem [resolvable:$true] %s403
      %406 = dma.vmem_to_hbm [thread:$0]  %s404, 128, %s7, [#allocation4]
    $region49: #{snn_forward.1} parent=1 // pred_fallthru
      _
    // Predicated region
    $region50: #{snn_forward.1} parent=1 // pred_check
      _
    $region51: #{snn_forward.1} parent=1 // pred_check_branch
      %408 = sbr.rel (0) target = $region53
    $region52: #{snn_forward.1} parent=1 // pred_region
      %409 = dma.done [#allocation4], 128
    $region53: #{snn_forward.1} parent=1 // pred_fallthru
      _
    %410 = vsyncpa [#allocation3], 1
    %411 = vsyncpa [#allocation6], 1
    %412 = vsyncpa [#allocation9], 1
    %413 = vsyncpa [#allocation4], 1

</llo_original>
